<compile_context>
chip_gen: v5e
topology: v5e:2x2
jax: 0.10.0
libtpu: 0.0.40
codegen_flags: <defaults>
</compile_context>

<pallas_src>
import numpy as np
import jax
import jax.numpy as jnp
from jax import lax
from jax.experimental import pallas as pl
from jax.experimental.pallas import tpu as pltpu

INPUT_DIM = 16      # per-entity feature dim fed to the action head
ACTION_DIM = 6      # basic actions
A_PAD = 128         # lane-dense logits / output width
NEG_INF = -1e10     # same mask value as the torch module


def _round_up(v, m):
    return ((v + m - 1) // m) * m


# ------------------------------ fused kernels ---------------------------------
def act_kernel_det(x_ref, bias_ref, w_ref, b_ref, out_ref):
    # One MXU matmul produces ALL logits (basic + attack) lane-dense.
    logits = (jnp.dot(x_ref[...], w_ref[...], preferred_element_type=jnp.float32)
              + b_ref[...] + bias_ref[...])
    lane = lax.broadcasted_iota(jnp.int32, logits.shape, 1)

    # argmax with first-index tie-break.
    lmax = jnp.max(logits, axis=-1, keepdims=True)
    action = jnp.min(jnp.where(logits >= lmax, lane, A_PAD), axis=-1, keepdims=True)

    # log_prob of the chosen action under the (masked) logits.
    lse = lmax + jnp.log(jnp.sum(jnp.exp(logits - lmax), axis=-1, keepdims=True))
    chosen = jnp.sum(jnp.where(lane == action, logits, 0.0), axis=-1, keepdims=True)
    logp = chosen - lse

    # Lane-dense output slab: lane 0 = action (as float), lane 1 = log_prob.
    out_ref[...] = jnp.where(lane == 0, action.astype(jnp.float32),
                             jnp.where(lane == 1, logp, 0.0))


def act_kernel_samp(x_ref, bias_ref, pick_bias_ref, w_ref, b_ref, out_ref):
    base = (jnp.dot(x_ref[...], w_ref[...], preferred_element_type=jnp.float32)
            + b_ref[...])
    logits = base + bias_ref[...]          # mask only   -> softmax
    pick = base + pick_bias_ref[...]       # mask + Gumbel noise -> selection
    lane = lax.broadcasted_iota(jnp.int32, pick.shape, 1)

    pmax = jnp.max(pick, axis=-1, keepdims=True)
    action = jnp.min(jnp.where(pick >= pmax, lane, A_PAD), axis=-1, keepdims=True)

    lmax = jnp.max(logits, axis=-1, keepdims=True)
    lse = lmax + jnp.log(jnp.sum(jnp.exp(logits - lmax), axis=-1, keepdims=True))
    chosen = jnp.sum(jnp.where(lane == action, logits, 0.0), axis=-1, keepdims=True)
    logp = chosen - lse

    out_ref[...] = jnp.where(lane == 0, action.astype(jnp.float32),
                             jnp.where(lane == 1, logp, 0.0))


# ------------------------------ weight folding --------------------------------
def _build_head_weights(W, b, ne_max, K):
    """Fold the 6-action Linear + mean-over-actions head into one (K, 128) block."""
    IN, AD = W.shape
    w_mean = jnp.mean(W, axis=1)          # mean over action dim (attack logits)
    b_mean = jnp.mean(b)

    # enemy block: (ne_max*IN, ne_max); column j holds w_mean in rows j*IN..(j+1)*IN
    row_enemy = jnp.arange(ne_max * IN) // IN
    enemy_block = jnp.where(row_enemy[:, None] == jnp.arange(ne_max)[None, :],
                            jnp.tile(w_mean, ne_max)[:, None], 0.0)

    top = jnp.concatenate([W, jnp.zeros((IN, A_PAD - AD), jnp.float32)], axis=1)
    mid = jnp.concatenate(
        [jnp.zeros((ne_max * IN, AD), jnp.float32),
         enemy_block,
         jnp.zeros((ne_max * IN, A_PAD - AD - ne_max), jnp.float32)], axis=1)
    parts = [top, mid]
    pad_rows = K - (1 + ne_max) * IN
    if pad_rows > 0:
        parts.append(jnp.zeros((pad_rows, A_PAD), jnp.float32))
    w_big = jnp.concatenate(parts, axis=0)

    b_big = jnp.concatenate(
        [b, jnp.full((ne_max,), b_mean, jnp.float32),
         jnp.zeros((A_PAD - AD - ne_max,), jnp.float32)]).reshape(1, A_PAD)
    return w_big, b_big


# --------------------------------- wrapper ------------------------------------
def entity_vae_act_forward(x_list, n_enemies, params, avail_list=None,
                           noise_list=None, deterministic=True):
    """Returns (actions (sum_bs,1) int32, action_log_probs (sum_bs,1) f32)."""
    IN = x_list[0].shape[-1]
    ne_max = max(n_enemies)
    nsel = _round_up(1 + ne_max, 8)          # self + enemies, padded to sublane multiple
    K = nsel * IN                            # flattened per-sample feature width
    bs_list = [int(x.shape[0]) for x in x_list]
    total = sum(bs_list)
    total_pad = _round_up(max(total, 8), 8)

    W = params['w'].astype(jnp.float32)       # (IN, 6), y = x @ W + b
    b = params['b'].reshape(-1).astype(jnp.float32)
    w_big, b_big = _build_head_weights(W, b, ne_max, K)

    sampling = not deterministic
    if sampling and noise_list is None:
        raise ValueError("sampling path requires caller-supplied Gumbel noise")

    # Pack all groups along the batch/sublane axis (single grid step).
    x_rows, bias_rows, pick_rows = [], [], []
    for g, (x_g, ne) in enumerate(zip(x_list, n_enemies)):
        bs, nent = x_g.shape[0], x_g.shape[1]
        sel = jnp.concatenate([x_g[:, :1], x_g[:, nent - ne:]], axis=1)   # (bs, 1+ne, IN)
        sel = sel.reshape(bs, (1 + ne) * IN).astype(jnp.float32)
        x_rows.append(jnp.pad(sel, ((0, 0), (0, K - (1 + ne) * IN))))

        n_act = ACTION_DIM + ne
        if avail_list is not None:
            mask_bias = jnp.where(avail_list[g] == 0, NEG_INF, 0.0).astype(jnp.float32)
        else:
            mask_bias = jnp.zeros((bs, n_act), jnp.float32)
        # lanes beyond this group's action count are padding -> always masked
        mask_bias = jnp.pad(mask_bias, ((0, 0), (0, A_PAD - n_act)),
                            constant_values=NEG_INF)
        bias_rows.append(mask_bias)

        if sampling:
            noise = jnp.pad(noise_list[g].astype(jnp.float32),
                            ((0, 0), (0, A_PAD - n_act)))
            pick_rows.append(mask_bias + noise)

    def stack_rows(rows):
        arr = jnp.concatenate(rows, axis=0)
        return jnp.pad(arr, ((0, total_pad - total), (0, 0)))

    x_all = stack_rows(x_rows)        # (total_pad, K)
    bias_all = stack_rows(bias_rows)  # (total_pad, A_PAD)

    out_specs = pl.BlockSpec((total_pad, A_PAD), lambda i: (0, 0))
    out_shape = jax.ShapeDtypeStruct((total_pad, A_PAD), jnp.float32)
    cparams = pltpu.CompilerParams(dimension_semantics=("arbitrary",))

    if sampling:
        pick_all = stack_rows(pick_rows)
        out = pl.pallas_call(
            act_kernel_samp,
            grid=(1,),
            in_specs=[
                pl.BlockSpec((total_pad, K), lambda i: (0, 0)),
                pl.BlockSpec((total_pad, A_PAD), lambda i: (0, 0)),
                pl.BlockSpec((total_pad, A_PAD), lambda i: (0, 0)),
                pl.BlockSpec((K, A_PAD), lambda i: (0, 0)),
                pl.BlockSpec((1, A_PAD), lambda i: (0, 0)),
            ],
            out_specs=out_specs, out_shape=out_shape, compiler_params=cparams,
        )(x_all, bias_all, pick_all, w_big, b_big)
    else:
        out = pl.pallas_call(
            act_kernel_det,
            grid=(1,),
            in_specs=[
                pl.BlockSpec((total_pad, K), lambda i: (0, 0)),
                pl.BlockSpec((total_pad, A_PAD), lambda i: (0, 0)),
                pl.BlockSpec((K, A_PAD), lambda i: (0, 0)),
                pl.BlockSpec((1, A_PAD), lambda i: (0, 0)),
            ],
            out_specs=out_specs, out_shape=out_shape, compiler_params=cparams,
        )(x_all, bias_all, w_big, b_big)

    actions = out[:total, 0].astype(jnp.int32).reshape(total, 1)
    logps = out[:total, 1].reshape(total, 1)
    return actions, logps


# ---------------------------- pure-JAX reference ------------------------------
def ref_forward(x_list, n_enemies, params, avail_list=None, noise_list=None,
                deterministic=True):
    W = params['w']
    b = params['b'].reshape(-1)
    acts, lps, logits_list = [], [], []
    for g, (x_g, ne) in enumerate(zip(x_list, n_enemies)):
        bs, nent = x_g.shape[0], x_g.shape[1]
        sel = jnp.concatenate([x_g[:, :1], x_g[:, nent - ne:]], axis=1)
        av = jnp.einsum('bed,da->bea', sel, W,
                        precision=lax.Precision.HIGHEST) + b
        basic = av[:, 0]                                  # (bs, 6)
        attack = jnp.mean(av[:, 1:], axis=-1)             # (bs, ne)
        logits = jnp.concatenate([basic, attack], axis=-1)
        if avail_list is not None:
            logits = jnp.where(avail_list[g] == 0, NEG_INF, logits)
        pick = logits
        if (not deterministic) and (noise_list is not None):
            pick = logits + noise_list[g]
        a = jnp.argmax(pick, axis=-1)
        logz = jax.nn.log_softmax(logits, axis=-1)
        lp = jnp.take_along_axis(logz, a[:, None], axis=-1)
        acts.append(a[:, None].astype(jnp.int32))
        lps.append(lp)
        logits_list.append(logits)
    return jnp.concatenate(acts, 0), jnp.concatenate(lps, 0), logits_list


# ----------------------------------- main --------------------------------------
if __name__ == "__main__":
    key = jax.random.PRNGKey(0)
    kw, kb, kx1, kx2, ka1, ka2, kn1, kn2 = jax.random.split(key, 8)
    params = {
        'w': jax.random.normal(kw, (INPUT_DIM, ACTION_DIM), jnp.float32)
             / jnp.sqrt(jnp.float32(INPUT_DIM)),
        'b': 0.1 * jax.random.normal(kb, (1, ACTION_DIM), jnp.float32),
    }

    n_agents = [3, 2]
    n_enemies = [2, 3]
    bs_list = [8, 6]
    x_list = []
    for k, bs, na, ne in zip([kx1, kx2], bs_list, n_agents, n_enemies):
        x_list.append(jax.random.normal(k, (bs, na + ne, INPUT_DIM), jnp.float32))
    avail_list = []
    for k, bs, ne in zip([ka1, ka2], bs_list, n_enemies):
        av = (jax.random.uniform(k, (bs, ACTION_DIM + ne)) > 0.3).astype(jnp.float32)
        av = av.at[:, 0].set(1.0)               # no-op always available
        avail_list.append(av)
    total = sum(bs_list)

    # ---- deterministic (mode) path ----
    actions, logp = entity_vae_act_forward(
        x_list, n_enemies, params, avail_list=avail_list, deterministic=True)
    actions = jax.block_until_ready(actions)
    logp = jax.block_until_ready(logp)

    ref_a, ref_lp, ref_logits = ref_forward(
        x_list, n_enemies, params, avail_list=avail_list, deterministic=True)

    assert actions.shape == (total, 1) and actions.dtype == jnp.int32, actions.shape
    assert logp.shape == (total, 1), logp.shape
    assert np.allclose(np.asarray(logp), np.asarray(ref_lp), atol=2e-2, rtol=2e-2), (
        float(jnp.max(jnp.abs(logp - ref_lp))))
    # kernel actions must be (near-)argmax of the reference logits
    off = 0
    for g, bs in enumerate(bs_list):
        lg = np.asarray(ref_logits[g])
        a_k = np.asarray(actions[off:off + bs, 0])
        picked = lg[np.arange(bs), a_k]
        assert np.all(lg.max(axis=-1) - picked < 5e-2), (g, lg.max(axis=-1) - picked)
        off += bs

    # ---- sampling path (Gumbel-max with externally supplied noise) ----
    noise_list = [jax.random.gumbel(k, (bs, ACTION_DIM + ne), jnp.float32)
                  for k, bs, ne in zip([kn1, kn2], bs_list, n_enemies)]
    s_actions, s_logp = entity_vae_act_forward(
        x_list, n_enemies, params, avail_list=avail_list,
        noise_list=noise_list, deterministic=False)
    s_actions = jax.block_until_ready(s_actions)
    s_logp = jax.block_until_ready(s_logp)
    assert s_actions.shape == (total, 1) and s_logp.shape == (total, 1)
    off = 0
    for g, (bs, ne) in enumerate(zip(bs_list, n_enemies)):
        a = np.asarray(s_actions[off:off + bs, 0])
        assert np.all((a >= 0) & (a < ACTION_DIM + ne)), a
        av = np.asarray(avail_list[g])
        assert np.all(av[np.arange(bs), a] > 0), "sampled an unavailable action"
        off += bs
    assert np.all(np.asarray(s_logp) < 1e-5)

    print("KERNEL_OK")
</pallas_src>

<mosaic_0001>
module attributes {stable_mosaic.version = 11 : i64} {
  func.func @act_kernel_det(%arg0: i32, %arg1: memref<16x128xf32, #tpu.memory_space<vmem>>, %arg2: memref<16x128xf32, #tpu.memory_space<vmem>>, %arg3: memref<128x128xf32, #tpu.memory_space<vmem>>, %arg4: memref<1x128xf32, #tpu.memory_space<vmem>>, %arg5: memref<16x128xf32, #tpu.memory_space<vmem>>) attributes {dimension_semantics = [#tpu.dimension_semantics<arbitrary>], iteration_bounds = array<i64: 1>, scalar_prefetch = 0 : i64, scratch_operands = 0 : i64, tpu.core_type = #tpu.core_type<tc>, window_params = [{pipeline_mode = #tpu.pipeline_mode<synchronous>, transform_indices = @transform_0, window_bounds = array<i64: 16, 128>}, {pipeline_mode = #tpu.pipeline_mode<synchronous>, transform_indices = @transform_1, window_bounds = array<i64: 16, 128>}, {pipeline_mode = #tpu.pipeline_mode<synchronous>, transform_indices = @transform_2, window_bounds = array<i64: 128, 128>}, {pipeline_mode = #tpu.pipeline_mode<synchronous>, transform_indices = @transform_3, window_bounds = array<i64: 1, 128>}, {pipeline_mode = #tpu.pipeline_mode<synchronous>, transform_indices = @transform_4, window_bounds = array<i64: 16, 128>}]} {
    %c0 = arith.constant 0 : index
    %c0_0 = arith.constant 0 : index
    %0 = vector.load %arg1[%c0, %c0_0] : memref<16x128xf32, #tpu.memory_space<vmem>>, vector<16x128xf32>
    %c0_1 = arith.constant 0 : index
    %c0_2 = arith.constant 0 : index
    %1 = vector.load %arg3[%c0_1, %c0_2] : memref<128x128xf32, #tpu.memory_space<vmem>>, vector<128x128xf32>
    %cst = arith.constant dense<0.000000e+00> : vector<16x128xf32>
    %2 = tpu.matmul %0, %1, %cst {dimension_numbers = #tpu.dot_dimension_numbers<[1], [0], [0], [1], [0, 0, 1, 1], [], []>} : vector<16x128xf32>, vector<128x128xf32>, vector<16x128xf32> -> vector<16x128xf32>
    %c0_3 = arith.constant 0 : index
    %c0_4 = arith.constant 0 : index
    %3 = vector.load %arg4[%c0_3, %c0_4] : memref<1x128xf32, #tpu.memory_space<vmem>>, vector<1x128xf32>
    %4 = vector.broadcast %3 : vector<1x128xf32> to vector<16x128xf32>
    %5 = arith.addf %2, %4 : vector<16x128xf32>
    %c0_5 = arith.constant 0 : index
    %c0_6 = arith.constant 0 : index
    %6 = vector.load %arg2[%c0_5, %c0_6] : memref<16x128xf32, #tpu.memory_space<vmem>>, vector<16x128xf32>
    %7 = arith.addf %5, %6 : vector<16x128xf32>
    %8 = tpu.iota {dimensions = array<i32: 1>} : vector<16x128xi32>
    %cst_7 = arith.constant dense<0xFF800000> : vector<16xf32>
    %9 = vector.multi_reduction <maximumf>, %7, %cst_7 [1] : vector<16x128xf32> to vector<16xf32>
    %10 = vector.shape_cast %9 : vector<16xf32> to vector<16x1xf32>
    %11 = vector.broadcast %10 : vector<16x1xf32> to vector<16x128xf32>
    %12 = arith.cmpf oge, %7, %11 : vector<16x128xf32>
    %c128_i32 = arith.constant 128 : i32
    %13 = vector.broadcast %c128_i32 : i32 to vector<16x128xi32>
    %14 = arith.select %12, %8, %13 : vector<16x128xi1>, vector<16x128xi32>
    %cst_8 = arith.constant dense<2147483647> : vector<16xi32>
    %15 = vector.multi_reduction <minsi>, %14, %cst_8 [1] : vector<16x128xi32> to vector<16xi32>
    %16 = vector.shape_cast %15 : vector<16xi32> to vector<16x1xi32>
    %17 = vector.broadcast %10 : vector<16x1xf32> to vector<16x128xf32>
    %18 = arith.subf %7, %17 : vector<16x128xf32>
    %19 = math.exp %18 : vector<16x128xf32>
    %cst_9 = arith.constant dense<0.000000e+00> : vector<16xf32>
    %20 = vector.multi_reduction <add>, %19, %cst_9 [1] : vector<16x128xf32> to vector<16xf32>
    %21 = vector.shape_cast %20 : vector<16xf32> to vector<16x1xf32>
    %22 = math.log %21 : vector<16x1xf32>
    %23 = arith.addf %10, %22 : vector<16x1xf32>
    %24 = vector.broadcast %16 : vector<16x1xi32> to vector<16x128xi32>
    %25 = arith.cmpi eq, %8, %24 : vector<16x128xi32>
    %cst_10 = arith.constant 0.000000e+00 : f32
    %26 = vector.broadcast %cst_10 : f32 to vector<16x128xf32>
    %27 = arith.select %25, %7, %26 : vector<16x128xi1>, vector<16x128xf32>
    %cst_11 = arith.constant dense<0.000000e+00> : vector<16xf32>
    %28 = vector.multi_reduction <add>, %27, %cst_11 [1] : vector<16x128xf32> to vector<16xf32>
    %29 = vector.shape_cast %28 : vector<16xf32> to vector<16x1xf32>
    %30 = arith.subf %29, %23 : vector<16x1xf32>
    %c0_i32 = arith.constant 0 : i32
    %31 = vector.broadcast %c0_i32 : i32 to vector<16x128xi32>
    %32 = arith.cmpi eq, %8, %31 : vector<16x128xi32>
    %33 = arith.sitofp %16 : vector<16x1xi32> to vector<16x1xf32>
    %c1_i32 = arith.constant 1 : i32
    %34 = vector.broadcast %c1_i32 : i32 to vector<16x128xi32>
    %35 = arith.cmpi eq, %8, %34 : vector<16x128xi32>
    %cst_12 = arith.constant 0.000000e+00 : f32
    %36 = vector.shape_cast %30 : vector<16x1xf32> to vector<16x1xf32>
    %37 = vector.broadcast %36 : vector<16x1xf32> to vector<16x128xf32>
    %38 = vector.broadcast %cst_12 : f32 to vector<16x128xf32>
    %39 = arith.select %35, %37, %38 : vector<16x128xi1>, vector<16x128xf32>
    %40 = vector.shape_cast %33 : vector<16x1xf32> to vector<16x1xf32>
    %41 = vector.broadcast %40 : vector<16x1xf32> to vector<16x128xf32>
    %42 = arith.select %32, %41, %39 : vector<16x128xi1>, vector<16x128xf32>
    %c0_13 = arith.constant 0 : index
    %c0_14 = arith.constant 0 : index
    %43 = vector.load %arg5[%c0_13, %c0_14] : memref<16x128xf32, #tpu.memory_space<vmem>>, vector<16x128xf32>
    tpu.vector_store %arg5[%c0_13, %c0_14], %42 {strides = array<i32>} : memref<16x128xf32, #tpu.memory_space<vmem>>, vector<16x128xf32>,
    return
  }
  func.func @transform_0(%arg0: i32) -> (i32, i32) {
    %c0_i32 = arith.constant 0 : i32
    %c0_i32_0 = arith.constant 0 : i32
    %c0_i32_1 = arith.constant 0 : i32
    return %c0_i32, %c0_i32_0 : i32, i32
  }
  func.func @transform_1(%arg0: i32) -> (i32, i32) {
    %c0_i32 = arith.constant 0 : i32
    %c0_i32_0 = arith.constant 0 : i32
    %c0_i32_1 = arith.constant 0 : i32
    return %c0_i32, %c0_i32_0 : i32, i32
  }
  func.func @transform_2(%arg0: i32) -> (i32, i32) {
    %c0_i32 = arith.constant 0 : i32
    %c0_i32_0 = arith.constant 0 : i32
    %c0_i32_1 = arith.constant 0 : i32
    return %c0_i32, %c0_i32_0 : i32, i32
  }
  func.func @transform_3(%arg0: i32) -> (i32, i32) {
    %c0_i32 = arith.constant 0 : i32
    %c0_i32_0 = arith.constant 0 : i32
    %c0_i32_1 = arith.constant 0 : i32
    return %c0_i32, %c0_i32_0 : i32, i32
  }
  func.func @transform_4(%arg0: i32) -> (i32, i32) {
    %c0_i32 = arith.constant 0 : i32
    %c0_i32_0 = arith.constant 0 : i32
    %c0_i32_1 = arith.constant 0 : i32
    return %c0_i32, %c0_i32_0 : i32, i32
  }
}

</mosaic_0001>

<llo_original>
// kernel: tpu_custom_call.1
$region0: #{tpu_custom_call.1}
  #allocation0 [shape = 'u32[]', space=smem, size = 0x4, offset = 0x4, fixed_abs, tag = 'smem constant byte address 0x4 - core index']
  #allocation1 [shape = 'u32[72,128]{1,0:T(1,128)}', space=vmem, size = 0x9000, scoped, tag = 'internal scratch']
  %s0 = inlined_call_operand.hbm [shape: f32[16,128], index: 0, kind: input, shape index: {}]
  %s1 = inlined_call_operand.hbm [shape: f32[16,128], index: 1, kind: input, shape index: {}]
  %s2 = inlined_call_operand.hbm [shape: f32[128,128], index: 2, kind: input, shape index: {}]
  %s3 = inlined_call_operand.vmem [shape: f32[1,128], index: 3, kind: input, shape index: {}]
  %s4 = inlined_call_operand.hbm [shape: f32[16,128], index: 4, kind: output, shape index: {}]
  %s5 = sld [smem:[#allocation0]]
  $region38: #{tpu_custom_call.1} parent=0
    _
  %s7 = ssub.s32 1, %s5
  %s8 = scalar_select 0, %s7, %s5
  $region1: #{tpu_custom_call.1} parent=0
    #allocation2 [shape = 'u8[8192]{0}', space=vmem, size = 0x2000, scoped, tag = 'input window, operand 0, single buffered']
    #allocation3 [shape = 's32[1]{0}', space=sflag, size = 0x4, scoped, tag = 'scoped memory for tpu_custom_call.1']
    #allocation4 [shape = 's32[1]{0}', space=sflag, size = 0x4, scoped, tag = 'scoped memory for tpu_custom_call.1']
    #allocation5 [shape = 'u8[8192]{0}', space=vmem, size = 0x2000, scoped, tag = 'input window, operand 1, single buffered']
    #allocation6 [shape = 's32[1]{0}', space=sflag, size = 0x4, scoped, tag = 'scoped memory for tpu_custom_call.1']
    #allocation7 [shape = 'u8[65536]{0}', space=vmem, size = 0x10000, scoped, tag = 'input window, operand 2, single buffered']
    #allocation8 [shape = 'u8[8192]{0}', space=vmem, size = 0x2000, scoped, tag = 'output window, operand 0, single buffered']
    %9 = vsyncpa [#allocation3], 0
    %10 = vsyncpa [#allocation6], 0
    %11 = vsyncpa [#allocation4], 0
    // Predicated region
    $region2: #{tpu_custom_call.1} parent=1 // pred_check
      _
    $region3: #{tpu_custom_call.1} parent=1 // pred_check_branch
      %13 = sbr.rel (0) target = $region5
    $region4: #{tpu_custom_call.1} parent=1 // pred_region
      %15 = vsyncadd [#allocation3], 0
      %s16 = sshll.u32 %s0, 4
      %s17 = int_to_ptr.hbm [resolvable:$true] %s16
      %s18 = sshll.u32 [#allocation2], 4
      %s19 = int_to_ptr.vmem [resolvable:$true] %s18
      %24 = dma.hbm_to_vmem [thread:$0]  %s17, 256, %s19, [#allocation3], 128, 128, 8
    $region5: #{tpu_custom_call.1} parent=1 // pred_fallthru
      _
    // Predicated region
    $region6: #{tpu_custom_call.1} parent=1 // pred_check
      _
    $region7: #{tpu_custom_call.1} parent=1 // pred_check_branch
      %26 = sbr.rel (0) target = $region9
    $region8: #{tpu_custom_call.1} parent=1 // pred_region
      %28 = vsyncadd [#allocation6], 0
      %s29 = sshll.u32 %s1, 4
      %s30 = int_to_ptr.hbm [resolvable:$true] %s29
      %s31 = sshll.u32 [#allocation5], 4
      %s32 = int_to_ptr.vmem [resolvable:$true] %s31
      %37 = dma.hbm_to_vmem [thread:$0]  %s30, 256, %s32, [#allocation6], 128, 128, 8
    $region9: #{tpu_custom_call.1} parent=1 // pred_fallthru
      _
    // Predicated region
    $region10: #{tpu_custom_call.1} parent=1 // pred_check
      _
    $region11: #{tpu_custom_call.1} parent=1 // pred_check_branch
      %39 = sbr.rel (0) target = $region13
    $region12: #{tpu_custom_call.1} parent=1 // pred_region
      %41 = vsyncadd [#allocation6], 0
      %s42 = sshll.u32 %s2, 4
      %s43 = int_to_ptr.hbm [resolvable:$true] %s42
      %s44 = sshll.u32 [#allocation7], 4
      %s45 = int_to_ptr.vmem [resolvable:$true] %s44
      %50 = dma.hbm_to_vmem [thread:$0]  %s43, 2048, %s45, [#allocation6], 128, 128, 8
    $region13: #{tpu_custom_call.1} parent=1 // pred_fallthru
      _
    // Predicated region
    $region14: #{tpu_custom_call.1} parent=1 // pred_check
      _
    $region15: #{tpu_custom_call.1} parent=1 // pred_check_branch
      %52 = sbr.rel (0) target = $region17
    $region16: #{tpu_custom_call.1} parent=1 // pred_region
      _
    $region17: #{tpu_custom_call.1} parent=1 // pred_fallthru
      _
    // Predicated region
    $region18: #{tpu_custom_call.1} parent=1 // pred_check
      _
    $region19: #{tpu_custom_call.1} parent=1 // pred_check_branch
      %54 = sbr.rel (0) target = $region21
    $region20: #{tpu_custom_call.1} parent=1 // pred_region
      %56 = dma.done [#allocation3], 256
    $region21: #{tpu_custom_call.1} parent=1 // pred_fallthru
      _
    // Predicated region
    $region22: #{tpu_custom_call.1} parent=1 // pred_check
      _
    $region23: #{tpu_custom_call.1} parent=1 // pred_check_branch
      %58 = sbr.rel (0) target = $region25
    $region24: #{tpu_custom_call.1} parent=1 // pred_region
      %60 = dma.done [#allocation6], 256
    $region25: #{tpu_custom_call.1} parent=1 // pred_fallthru
      _
    // Predicated region
    $region26: #{tpu_custom_call.1} parent=1 // pred_check
      _
    $region27: #{tpu_custom_call.1} parent=1 // pred_check_branch
      %62 = sbr.rel (0) target = $region29
    $region28: #{tpu_custom_call.1} parent=1 // pred_region
      %64 = dma.done [#allocation6], 2048
    $region29: #{tpu_custom_call.1} parent=1 // pred_fallthru
      _
    %v65 = vld [vmem:[#allocation2] sm:$0xff]
    %v66 = vld [vmem:[#allocation2 + $0x8] sm:$0xff]
    %v67 = vld [vmem:[#allocation7] sm:$0xff]
    %v68 = vld [vmem:[#allocation7 + $0x8] sm:$0xff]
    %v69 = vld [vmem:[#allocation7 + $0x10] sm:$0xff]
    %v70 = vld [vmem:[#allocation7 + $0x18] sm:$0xff]
    %v71 = vld [vmem:[#allocation7 + $0x20] sm:$0xff]
    %v72 = vld [vmem:[#allocation7 + $0x28] sm:$0xff]
    %v73 = vld [vmem:[#allocation7 + $0x30] sm:$0xff]
    %v74 = vld [vmem:[#allocation7 + $0x38] sm:$0xff]
    %v75 = vld [vmem:[#allocation7 + $0x40] sm:$0xff]
    %v76 = vld [vmem:[#allocation7 + $0x48] sm:$0xff]
    %v77 = vld [vmem:[#allocation7 + $0x50] sm:$0xff]
    %v78 = vld [vmem:[#allocation7 + $0x58] sm:$0xff]
    %v79 = vld [vmem:[#allocation7 + $0x60] sm:$0xff]
    %v80 = vld [vmem:[#allocation7 + $0x68] sm:$0xff]
    %v81 = vld [vmem:[#allocation7 + $0x70] sm:$0xff]
    %v82 = vld [vmem:[#allocation7 + $0x78] sm:$0xff]
    %v83 = vld [vmem:[%s3] sm:$0x1]
    %v85 = vperm.slane %v83, 0
    %87 = vmatpush.msra.mxu0 %v82
    %88 = vmatpush.msra.mxu0 %v81
    %89 = vmatpush.msra.mxu0 %v80
    %90 = vmatpush.msra.mxu0 %v79
    %91 = vmatpush.msra.mxu0 %v78
    %92 = vmatpush.msra.mxu0 %v77
    %93 = vmatpush.msra.mxu0 %v76
    %94 = vmatpush.msra.mxu0 %v75
    %95 = vmatpush.msra.mxu0 %v74
    %96 = vmatpush.msra.mxu0 %v73
    %97 = vmatpush.msra.mxu0 %v72
    %98 = vmatpush.msra.mxu0 %v71
    %99 = vmatpush.msra.mxu0 %v70
    %100 = vmatpush.msra.mxu0 %v69
    %101 = vmatpush.msra.mxu0 %v68
    %102 = vmatpush.msra.mxu0 %v67
    %103 = vmatmul.f32.gmra.mxu0 %v65
    %v104 = vpop.f32.mrf.mxu0
    %v105 = vadd.f32 %v85, %v104
    %106 = vmatmul.f32.gmra.mxu0 %v66
    %v107 = vpop.f32.mrf.mxu0
    %v108 = vadd.f32 %v85, %v107
    %109 = vdwg.mxu0
    %v110 = vld [vmem:[#allocation5] sm:$0xff]
    %v111 = vld [vmem:[#allocation5 + $0x8] sm:$0xff]
    %v112 = vadd.f32 %v105, %v110
    %v113 = vadd.f32 %v108, %v111
    %v114 = vlaneseq
    %v115 = vand.u32 %v114, 127
    %116 = vmax.xlane.f32.xlu0 %v112
    %v117 = vpop.xlane.xlu0 %116
    %118 = vmax.xlane.f32.xlu0 %v113
    %v119 = vpop.xlane.xlu0 %118
    %vm120 = vcmp.ge.f32.partialorder %v112, %v117
    %vm121 = vcmp.ge.f32.partialorder %v113, %v119
    %v122 = vsel %vm120, %v115, 128
    %v123 = vsel %vm121, %v115, 128
    %v124 = vand.u32 %v122, 65535
    %v125 = vshra.s32 %v122, 16
    %v126 = vcvt.s32.f32 %v124
    %v127 = vcvt.s32.f32 %v125
    %128 = vmin.xlane.f32.xlu0 %v127
    %v129 = vpop.xlane.xlu0 %128
    %vm130 = vcmp.eq.f32.partialorder %v127, %v129
    %v131 = vsel %vm130, %v126, inf
    %132 = vmin.xlane.f32.xlu0 %v131
    %v133 = vpop.xlane.xlu0 %132
    %v134 = vcvt.f32.s32 %v133
    %v135 = vcvt.f32.s32 %v129
    %v136 = vshll.u32 %v135, 16
    %v137 = vadd.s32 %v136, %v134
    %v138 = vand.u32 %v123, 65535
    %v139 = vshra.s32 %v123, 16
    %v140 = vcvt.s32.f32 %v138
    %v141 = vcvt.s32.f32 %v139
    %142 = vmin.xlane.f32.xlu0 %v141
    %v143 = vpop.xlane.xlu0 %142
    %vm144 = vcmp.eq.f32.partialorder %v141, %v143
    %v145 = vsel %vm144, %v140, inf
    %146 = vmin.xlane.f32.xlu0 %v145
    %v147 = vpop.xlane.xlu0 %146
    %v148 = vcvt.f32.s32 %v147
    %v149 = vcvt.f32.s32 %v143
    %v150 = vshll.u32 %v149, 16
    %v151 = vadd.s32 %v150, %v148
    %v152 = vsub.f32 %v112, %v117
    %v153 = vsub.f32 %v113, %v119
    %v154 = vmul.f32 %v152, 1.442695
    %v155 = vpow.pop %v154
    %v156 = vmul.f32 %v153, 1.442695
    %v157 = vpow.pop %v156
    %158 = vadd.xlane.f32.xlu0 %v155
    %v159 = vpop.xlane.xlu0 %158
    %160 = vadd.xlane.f32.xlu0 %v157
    %v161 = vpop.xlane.xlu0 %160
    %v162 = vlog2.pop %v159
    %v163 = vmul.f32 %v162, 0.6931472
    %v164 = vlog2.pop %v161
    %v165 = vmul.f32 %v164, 0.6931472
    %v166 = vadd.f32 %v117, %v163
    %v167 = vadd.f32 %v119, %v165
    %vm168 = vcmp.eq.s32.totalorder %v115, %v137
    %vm169 = vcmp.eq.s32.totalorder %v115, %v151
    %v170 = vsel %vm168, %v112, 0.0
    %v171 = vsel %vm169, %v113, 0.0
    %172 = vadd.xlane.f32.xlu0 %v170
    %v173 = vpop.xlane.xlu0 %172
    %174 = vadd.xlane.f32.xlu0 %v171
    %v175 = vpop.xlane.xlu0 %174
    %v176 = vsub.f32 %v173, %v166
    %v177 = vsub.f32 %v175, %v167
    %vm178 = vcmp.eq.s32.totalorder %v115, 0
    %v179 = vcvt.s32.f32 %v137
    %v180 = vcvt.s32.f32 %v151
    %vm181 = vcmp.eq.s32.totalorder %v115, 1
    %v182 = vsel %vm181, %v176, 0.0
    %v183 = vsel %vm181, %v177, 0.0
    %v184 = vsel %vm178, %v179, %v182
    %v185 = vsel %vm178, %v180, %v183
    %186 = vst [vmem:[#allocation8] sm:$0xff] %v184
    %187 = vst [vmem:[#allocation8 + $0x8] sm:$0xff] %v185
    // Predicated region
    $region30: #{tpu_custom_call.1} parent=1 // pred_check
      _
    $region31: #{tpu_custom_call.1} parent=1 // pred_check_branch
      %189 = sbr.rel (0) target = $region33
    $region32: #{tpu_custom_call.1} parent=1 // pred_region
      %191 = vsyncadd [#allocation4], 0
      %s192 = sshll.u32 [#allocation8], 4
      %s193 = int_to_ptr.vmem [resolvable:$true] %s192
      %s194 = sshll.u32 %s4, 4
      %s195 = int_to_ptr.hbm [resolvable:$true] %s194
      %200 = dma.vmem_to_hbm [thread:$0]  %s193, 256, %s195, [#allocation4], 128, 128, 8
    $region33: #{tpu_custom_call.1} parent=1 // pred_fallthru
      _
    // Predicated region
    $region34: #{tpu_custom_call.1} parent=1 // pred_check
      _
    $region35: #{tpu_custom_call.1} parent=1 // pred_check_branch
      %202 = sbr.rel (0) target = $region37
    $region36: #{tpu_custom_call.1} parent=1 // pred_region
      %204 = dma.done [#allocation4], 256
    $region37: #{tpu_custom_call.1} parent=1 // pred_fallthru
      _
    %205 = vsyncpa [#allocation3], 1
    %206 = vsyncpa [#allocation6], 1
    %207 = vsyncpa [#allocation4], 1

</llo_original>
